<compile_context>
chip_gen: v6e
topology: v6e:2x2x1
jax: 0.10.0
libtpu: 0.0.40
codegen_flags: <defaults>
</compile_context>

<pallas_src>
import math
import functools

import jax
import jax.numpy as jnp
from jax.experimental import pallas as pl
from jax.experimental.pallas import tpu as pltpu


# ----------------------------------------------------------------------------
# PE buffer (module __init__): shape [max_len, d_model]
# ----------------------------------------------------------------------------
def build_positional_encoding(max_len: int, d_model: int, dtype=jnp.float32):
    pos = jnp.arange(max_len, dtype=jnp.float32)[:, None]                      # (L, 1)
    div = jnp.exp(jnp.arange(0, d_model, 2, dtype=jnp.float32)
                  * (-math.log(10000.0) / d_model))                            # (D/2,)
    ang = pos / div                                                            # matches reference exactly
    pe = jnp.zeros((max_len, d_model), jnp.float32)
    pe = pe.at[:, 0::2].set(jnp.sin(ang))
    pe = pe.at[:, 1::2].set(jnp.cos(ang))
    return pe.astype(dtype)


# ----------------------------------------------------------------------------
# Kernels
# ----------------------------------------------------------------------------
def _broadcast_pe(pe, batch):
    # (TS, D) -> (TS, B, D): broadcast the per-position row across the batch axis.
    ts, d = pe.shape
    return jax.lax.broadcast_in_dim(pe, (ts, batch, d), (0, 2))


def _add_pe_kernel(x_ref, pe_ref, o_ref):
    pe3 = _broadcast_pe(pe_ref[...], x_ref.shape[1])
    o_ref[...] = (x_ref[...] + pe3.astype(x_ref.dtype)).astype(o_ref.dtype)


def _add_pe_dropout_kernel(x_ref, pe_ref, bits_ref, o_ref, *, p: float):
    pe3 = _broadcast_pe(pe_ref[...], x_ref.shape[1])
    y = x_ref[...] + pe3.astype(x_ref.dtype)
    # Inverted dropout: keep with prob (1-p), scale survivors by 1/(1-p).
    threshold = min(int(p * (2.0 ** 32)), 2 ** 32 - 1)
    keep = bits_ref[...] >= jnp.uint32(threshold)
    scale = 1.0 / (1.0 - p)
    o_ref[...] = (y * (keep.astype(y.dtype) * scale)).astype(o_ref.dtype)


# ----------------------------------------------------------------------------
# Wrapper
# ----------------------------------------------------------------------------
def _row_tile(S, B, D, itemsize, target_bytes=4 * 1024 * 1024):
    """Sequence-tile size: biggest multiple-of-8 row count whose x-tile ~= 4 MiB."""
    rows_per_tile = max(1, target_bytes // max(1, B * D * itemsize))
    ts = min(S, int(rows_per_tile))
    if ts < S:
        ts = max(8, (ts // 8) * 8)
    return ts


@functools.partial(jax.jit, static_argnames=("p", "training"))
def positional_encoder(x, pe_full, rng_key=None, *, p: float = 0.1, training: bool = False):
    """Forward pass of PostionalEncoder.

    x:       (seq_len, batch, d_model)
    pe_full: (max_len, d_model) buffer from build_positional_encoding
    rng_key: jax PRNG key, only used when training=True and p > 0
    """
    S, B, D = x.shape
    max_len, d_model = pe_full.shape
    if d_model != D:
        raise ValueError(f"d_model mismatch: x has {D}, PE has {d_model}")
    if S > max_len:
        raise ValueError(f"seq_len {S} exceeds max_len {max_len}")

    pe_arr = pe_full.astype(x.dtype)
    ts = _row_tile(S, B, D, x.dtype.itemsize)
    # (8,128) rule for the PE block: second-to-last dim (ts) must be a multiple
    # of 8 or equal the full array extent.  If ts is ragged, slice PE to S rows
    # so the block spans the whole (sliced) array.
    if ts % 8 != 0 and ts != pe_arr.shape[0]:
        pe_arr = pe_arr[:S]

    grid = (pl.cdiv(S, ts),)
    x_spec = pl.BlockSpec((ts, B, D), lambda i: (i, 0, 0))
    pe_spec = pl.BlockSpec((ts, D), lambda i: (i, 0))
    cparams = pltpu.CompilerParams(
        dimension_semantics=("parallel",),
        vmem_limit_bytes=48 * 1024 * 1024,
    )

    if (not training) or p == 0.0:
        # eval-mode dropout is the identity
        return pl.pallas_call(
            _add_pe_kernel,
            out_shape=jax.ShapeDtypeStruct(x.shape, x.dtype),
            grid=grid,
            in_specs=[x_spec, pe_spec],
            out_specs=x_spec,
            compiler_params=cparams,
        )(x, pe_arr)

    if p >= 1.0:
        # degenerate case: everything dropped (avoids 1/(1-p) overflow)
        return jnp.zeros_like(x)

    # Uniform mask bits generated outside the kernel (see header note).
    bits = jax.random.bits(rng_key, x.shape, jnp.uint32)
    kernel = functools.partial(_add_pe_dropout_kernel, p=p)
    return pl.pallas_call(
        kernel,
        out_shape=jax.ShapeDtypeStruct(x.shape, x.dtype),
        grid=grid,
        in_specs=[x_spec, pe_spec, x_spec],
        out_specs=x_spec,
        compiler_params=cparams,
    )(x, pe_arr, bits)


# ----------------------------------------------------------------------------
# Demo / self-check
# ----------------------------------------------------------------------------
if __name__ == "__main__":
    key = jax.random.PRNGKey(0)
    k_x, k_drop = jax.random.split(key)

    # Small shapes consistent with the module's forward: [seq_len, batch, d_model]
    d_model, max_len = 32, 64   # module default max_len is 5000; only first S rows used
    S, B = 8, 2

    x = jax.random.normal(k_x, (S, B, d_model), dtype=jnp.float32)
    pe_full = build_positional_encoding(max_len, d_model)
    pe_sliced = pe_full[:S][:, None, :]                       # (S, 1, D) reference view

    # --- eval mode (dropout = identity): verify against pure-JAX reference ---
    y = positional_encoder(x, pe_full, p=0.1, training=False)
    y = jax.block_until_ready(y)
    ref = x + pe_sliced
    assert y.shape == x.shape and y.dtype == x.dtype
    assert jnp.allclose(y, ref, atol=1e-6), "positional-encoding add mismatch"

    # --- training mode: inverted dropout, verified against an identical mask ---
    p = 0.1
    yt = positional_encoder(x, pe_full, k_drop, p=p, training=True)
    yt = jax.block_until_ready(yt)
    bits_ref = jax.random.bits(k_drop, x.shape, jnp.uint32)
    keep_ref = bits_ref >= jnp.uint32(min(int(p * (2.0 ** 32)), 2 ** 32 - 1))
    ref_t = jnp.where(keep_ref, (x + pe_sliced) * (1.0 / (1.0 - p)), 0.0)
    assert yt.shape == x.shape and yt.dtype == x.dtype
    assert jnp.allclose(yt, ref_t, atol=1e-6), "dropout path mismatch"

    print("KERNEL_OK")
</pallas_src>

<mosaic_0001>
module attributes {stable_mosaic.version = 11 : i64} {
  func.func @_add_pe_kernel(%arg0: i32, %arg1: memref<8x2x32xf32, #tpu.memory_space<vmem>>, %arg2: memref<8x32xf32, #tpu.memory_space<vmem>>, %arg3: memref<8x2x32xf32, #tpu.memory_space<vmem>>) attributes {dimension_semantics = [#tpu.dimension_semantics<parallel>], iteration_bounds = array<i64: 1>, scalar_prefetch = 0 : i64, scratch_operands = 0 : i64, tpu.core_type = #tpu.core_type<tc>, window_params = [{transform_indices = @transform_0, window_bounds = array<i64: 8, 2, 32>}, {transform_indices = @transform_1, window_bounds = array<i64: 8, 32>}, {transform_indices = @transform_2, window_bounds = array<i64: 8, 2, 32>}]} {
    %c0 = arith.constant 0 : index
    %c0_0 = arith.constant 0 : index
    %0 = vector.load %arg2[%c0, %c0_0] : memref<8x32xf32, #tpu.memory_space<vmem>>, vector<8x32xf32>
    %1 = vector.shape_cast %0 : vector<8x32xf32> to vector<8x1x32xf32>
    %2 = vector.broadcast %1 : vector<8x1x32xf32> to vector<8x2x32xf32>
    %c0_1 = arith.constant 0 : index
    %c0_2 = arith.constant 0 : index
    %c0_3 = arith.constant 0 : index
    %3 = vector.load %arg1[%c0_1, %c0_2, %c0_3] : memref<8x2x32xf32, #tpu.memory_space<vmem>>, vector<8x2x32xf32>
    %4 = arith.addf %3, %2 : vector<8x2x32xf32>
    %c0_4 = arith.constant 0 : index
    %c0_5 = arith.constant 0 : index
    %c0_6 = arith.constant 0 : index
    %5 = vector.load %arg3[%c0_4, %c0_5, %c0_6] : memref<8x2x32xf32, #tpu.memory_space<vmem>>, vector<8x2x32xf32>
    tpu.vector_store %arg3[%c0_4, %c0_5, %c0_6], %4 {strides = array<i32>} : memref<8x2x32xf32, #tpu.memory_space<vmem>>, vector<8x2x32xf32>,
    return
  }
  func.func @transform_0(%arg0: i32) -> (i32, i32, i32) {
    %c0_i32 = arith.constant 0 : i32
    %c0_i32_0 = arith.constant 0 : i32
    %c0_i32_1 = arith.constant 0 : i32
    return %arg0, %c0_i32, %c0_i32_0 : i32, i32, i32
  }
  func.func @transform_1(%arg0: i32) -> (i32, i32) {
    %c0_i32 = arith.constant 0 : i32
    %c0_i32_0 = arith.constant 0 : i32
    return %arg0, %c0_i32 : i32, i32
  }
  func.func @transform_2(%arg0: i32) -> (i32, i32, i32) {
    %c0_i32 = arith.constant 0 : i32
    %c0_i32_0 = arith.constant 0 : i32
    %c0_i32_1 = arith.constant 0 : i32
    return %arg0, %c0_i32, %c0_i32_0 : i32, i32, i32
  }
}

</mosaic_0001>

<llo_original>
// kernel: positional_encoder.1
$region0: #{positional_encoder.1}
  #allocation0 [shape = 'u32[]', space=smem, size = 0x4, offset = 0x4, fixed_abs, tag = 'smem constant byte address 0x4 - core index']
  #allocation1 [shape = 'u32[144,128]{1,0:T(1,128)}', space=vmem, size = 0x12000, scoped, tag = 'internal scratch']
  %s0 = inlined_call_operand.vmem [shape: f32[8,2,32], index: 0, kind: input, shape index: {}]
  %s1 = inlined_call_operand.vmem [shape: f32[64,32], index: 1, kind: input, shape index: {}]
  %s2 = inlined_call_operand.hbm [shape: f32[8,2,32], index: 2, kind: output, shape index: {}]
  %s3 = sld [smem:[#allocation0]]
  $region18: #{positional_encoder.1} parent=0
    _
  %s5 = ssub.s32 1, %s3
  %s6 = scalar_select 0, %s5, %s3
  $region1: #{positional_encoder.1} parent=0
    #allocation2 [shape = 'u8[8192]{0}', space=vmem, size = 0x2000, scoped, tag = 'output window, operand 0, single buffered']
    #allocation3 [shape = 's32[1]{0}', space=sflag, size = 0x4, scoped, tag = 'scoped memory for positional_encoder.1']
    %7 = vsyncpa [#allocation3], 0
    // Predicated region
    $region2: #{positional_encoder.1} parent=1 // pred_check
      _
    $region3: #{positional_encoder.1} parent=1 // pred_check_branch
      %9 = sbr.rel (0) target = $region5
    $region4: #{positional_encoder.1} parent=1 // pred_region
      _
    $region5: #{positional_encoder.1} parent=1 // pred_fallthru
      _
    // Predicated region
    $region6: #{positional_encoder.1} parent=1 // pred_check
      _
    $region7: #{positional_encoder.1} parent=1 // pred_check_branch
      %11 = sbr.rel (0) target = $region9
    $region8: #{positional_encoder.1} parent=1 // pred_region
      _
    $region9: #{positional_encoder.1} parent=1 // pred_fallthru
      _
    %v12 = vld [vmem:[%s1] sm:$0xff]
    %v14 = vcombine.high %v12, %v12
    %v16 = vunpack.c.l.s4 1966171168
    %v17 = vunpack.c.0.s8 %v16
    %v18 = vlaneseq
    %v19 = vshrl.u32 %v18, 7
    %v20 = vsub.s32 %v17, %v19
    %v21 = vrot.slane %v12, %v20
    %v23 = vunpack.c.l.s4 1966171168
    %v24 = vunpack.c.0.s8 %v23
    %v25 = vlaneseq
    %v26 = vshrl.u32 %v25, 7
    %v27 = vsub.s32 %v24, %v26
    %v28 = vrot.slane %v14, %v27
    %v29 = vcombine.high %v21, %v21
    %v30 = vcombine.high %v28, %v28
    %v32 = vunpack.c.l.s4 1966171168
    %v33 = vunpack.c.0.s8 %v32
    %v34 = vlaneseq
    %v35 = vshrl.u32 %v34, 7
    %v36 = vsub.s32 %v33, %v35
    %v37 = vrot.slane %v21, %v36
    %v39 = vunpack.c.l.s4 1966171168
    %v40 = vunpack.c.0.s8 %v39
    %v41 = vlaneseq
    %v42 = vshrl.u32 %v41, 7
    %v43 = vsub.s32 %v40, %v42
    %v44 = vrot.slane %v28, %v43
    %v46 = vunpack.c.l.s4 1966171168
    %v47 = vunpack.c.0.s8 %v46
    %v48 = vlaneseq
    %v49 = vshrl.u32 %v48, 7
    %v50 = vsub.s32 %v47, %v49
    %v51 = vrot.slane %v29, %v50
    %v53 = vunpack.c.l.s4 1966171168
    %v54 = vunpack.c.0.s8 %v53
    %v55 = vlaneseq
    %v56 = vshrl.u32 %v55, 7
    %v57 = vsub.s32 %v54, %v56
    %v58 = vrot.slane %v30, %v57
    %v59 = vcombine.high %v37, %v37
    %v60 = vcombine.high %v44, %v44
    %v61 = vcombine.high %v51, %v51
    %v62 = vcombine.high %v58, %v58
    %v63 = vlaneseq
    %v64 = vshrl.u32 %v63, 7
    %v65 = vsub.s32 0, %v64
    %v66 = vrot.slane %v37, %v65
    %v67 = vlaneseq
    %v68 = vshrl.u32 %v67, 7
    %v69 = vsub.s32 0, %v68
    %v70 = vrot.slane %v51, %v69
    %v71 = vlaneseq
    %v72 = vshrl.u32 %v71, 7
    %v73 = vsub.s32 0, %v72
    %v74 = vrot.slane %v59, %v73
    %v75 = vlaneseq
    %v76 = vshrl.u32 %v75, 7
    %v77 = vsub.s32 0, %v76
    %v78 = vrot.slane %v61, %v77
    %v79 = vlaneseq
    %v80 = vshrl.u32 %v79, 7
    %v81 = vsub.s32 0, %v80
    %v82 = vrot.slane %v44, %v81
    %v83 = vlaneseq
    %v84 = vshrl.u32 %v83, 7
    %v85 = vsub.s32 0, %v84
    %v86 = vrot.slane %v58, %v85
    %v87 = vlaneseq
    %v88 = vshrl.u32 %v87, 7
    %v89 = vsub.s32 0, %v88
    %v90 = vrot.slane %v60, %v89
    %v91 = vlaneseq
    %v92 = vshrl.u32 %v91, 7
    %v93 = vsub.s32 0, %v92
    %v94 = vrot.slane %v62, %v93
    %v103 = vld [vmem:[%s0] sm:$0x3]
    %v104 = vld [vmem:[%s0 + $0x2] sm:$0x3]
    %v105 = vld [vmem:[%s0 + $0x4] sm:$0x3]
    %v106 = vld [vmem:[%s0 + $0x6] sm:$0x3]
    %v107 = vld [vmem:[%s0 + $0x8] sm:$0x3]
    %v108 = vld [vmem:[%s0 + $0xa] sm:$0x3]
    %v109 = vld [vmem:[%s0 + $0xc] sm:$0x3]
    %v110 = vld [vmem:[%s0 + $0xe] sm:$0x3]
    %v111 = vadd.f32 %v103, %v66
    %v112 = vadd.f32 %v104, %v70
    %v113 = vadd.f32 %v105, %v74
    %v114 = vadd.f32 %v106, %v78
    %v115 = vadd.f32 %v107, %v82
    %v116 = vadd.f32 %v108, %v86
    %v117 = vadd.f32 %v109, %v90
    %v118 = vadd.f32 %v110, %v94
    %vm119 = vcmask 254976
    %120 = vst.msk [vmem:[#allocation2] sm:$0x3] %vm119, %v111
    %121 = vst.msk [vmem:[#allocation2 + $0x2] sm:$0x3] %vm119, %v112
    %122 = vst.msk [vmem:[#allocation2 + $0x4] sm:$0x3] %vm119, %v113
    %123 = vst.msk [vmem:[#allocation2 + $0x6] sm:$0x3] %vm119, %v114
    %124 = vst.msk [vmem:[#allocation2 + $0x8] sm:$0x3] %vm119, %v115
    %125 = vst.msk [vmem:[#allocation2 + $0xa] sm:$0x3] %vm119, %v116
    %126 = vst.msk [vmem:[#allocation2 + $0xc] sm:$0x3] %vm119, %v117
    %127 = vst.msk [vmem:[#allocation2 + $0xe] sm:$0x3] %vm119, %v118
    // Predicated region
    $region10: #{positional_encoder.1} parent=1 // pred_check
      _
    $region11: #{positional_encoder.1} parent=1 // pred_check_branch
      %129 = sbr.rel (0) target = $region13
    $region12: #{positional_encoder.1} parent=1 // pred_region
      %s131 = ssub.s32 256, 256
      %132 = vsyncadd [#allocation3], %s131
      %s133 = sshll.u32 [#allocation2], 4
      %s134 = int_to_ptr.vmem [resolvable:$true] %s133
      %139 = dma.vmem_to_hbm [thread:$0]  %s134, 256, %s2, [#allocation3], 32, 32, 2
    $region13: #{positional_encoder.1} parent=1 // pred_fallthru
      _
    // Predicated region
    $region14: #{positional_encoder.1} parent=1 // pred_check
      _
    $region15: #{positional_encoder.1} parent=1 // pred_check_branch
      %141 = sbr.rel (0) target = $region17
    $region16: #{positional_encoder.1} parent=1 // pred_region
      %142 = dma.done [#allocation3], 256
    $region17: #{positional_encoder.1} parent=1 // pred_fallthru
      _
    %143 = vsyncpa [#allocation3], 1

</llo_original>
